<compile_context>
chip_gen: v7x
topology: tpu7x:2x2x1
jax: 0.10.0
libtpu: 0.0.40
codegen_flags: <defaults>
</compile_context>

<pallas_src>
import jax
import jax.numpy as jnp
from jax.experimental import pallas as pl
from jax.experimental.pallas import tpu as pltpu

HIDDEN_LAYER_SIZE = 256
LANE = 128


def _critic_kernel(x_ref, w1_ref, b1_ref, w2_ref, b2_ref, o_ref):
    # x_ref : (TB, D) bf16  batch tile of the state (unpadded feature dim)
    # w1_ref: (H,  D) bf16  fc1 weight, PyTorch (out, in) layout
    # b1_ref: (H,  1) f32   fc1 bias column
    # w2_ref: (H,  1) f32   fc2 weight column
    # b2_ref: (1,)    f32   fc2 bias scalar (SMEM)
    # o_ref : (1, TB) f32   lane-dense output row (batch on lanes)

    # fc1: contract the feature dims of w1 and x -> (H, TB); batch stays on
    # lanes. bf16 operands, f32 accumulation on the MXU.
    h = jax.lax.dot_general(
        w1_ref[...], x_ref[...],
        dimension_numbers=(((1,), (1,)), ((), ())),
        preferred_element_type=jnp.float32,
    )
    h = jnp.maximum(h + b1_ref[...], 0.0)            # bias (lane-broadcast) + ReLU

    # fc2 (256 -> 1): VPU multiply + sublane reduction instead of an N=1 MXU matmul.
    out_row = jnp.sum(h * w2_ref[...], axis=0, keepdims=True) + b2_ref[0]
    o_ref[...] = out_row.astype(o_ref.dtype)


def prepare_critic_params(w1, b1, w2, b2):
    """One-time prep of PyTorch nn.Linear-layout params into kernel-ready form.

    w1: (H, state_dim), b1: (H,), w2: (1, H), b2: (1,)
    The streamed weight is stored bf16 (MXU-native); biases / fc2 column stay f32.
    Call once and reuse -- this is deliberately outside the per-call path.
    """
    H = w1.shape[0]
    return (
        w1.astype(jnp.bfloat16),                 # (H, D)  fc1 weight, bf16
        b1.reshape(H, 1).astype(jnp.float32),    # (H, 1)  fc1 bias column
        w2.reshape(H, 1).astype(jnp.float32),    # (H, 1)  fc2 weight column
        b2.reshape(1).astype(jnp.float32),       # (1,)    fc2 bias scalar
    )


def _pick_block_b(batch, max_block=4096):
    # Large tiles to amortize the fixed per-step pipeline overhead, but keep
    # >= ~4 grid steps at large batch so v7x's two TensorCores both get work.
    # max_block=4096: x double-buffer (~2 MiB bf16 at 128 lanes) + (H, 4096)
    # f32 hidden temp (~4 MiB) fit comfortably in v5e's 16 MiB scoped default.
    tgt = pl.cdiv(batch, 4)
    tgt = pl.cdiv(tgt, LANE) * LANE
    return max(LANE, min(max_block, tgt))


def critic_forward(state, params, *, block_b=None, min_pallas_batch=0):
    """Pensieve Critic forward: relu(state @ w1.T + b1) @ w2.T + b2.

    state:  (B, state_dim)
    params: output of prepare_critic_params
    returns (B, 1) f32
    """
    w1, b1_c, w2_c, b2_s = params
    B, D = state.shape
    H = w1.shape[0]

    # Stream activations as bf16 (ideally the producer already emits bf16 so no
    # extra cast/copy lands in HBM here).
    x = state if state.dtype == jnp.bfloat16 else state.astype(jnp.bfloat16)

    if B < min_pallas_batch:
        # Tiny problem: skip pallas_call launch overhead, let XLA fuse the GEMMs.
        h = jnp.maximum(
            jnp.dot(x, w1.T, preferred_element_type=jnp.float32) + b1_c[:, 0][None, :],
            0.0)
        return (h @ w2_c + b2_s[0]).astype(jnp.float32)

    if block_b is None:
        block_b = _pick_block_b(B)
    # Lane-dense (1, block_b) output tiles require a multiple of 128.
    assert block_b % LANE == 0, "block_b must be a multiple of 128"

    grid_b = pl.cdiv(B, block_b)   # boundary block may be partial; no HBM batch pad.
    # OOB rows of a partial x block read unspecified data, but nothing reduces
    # across the batch axis in-kernel and the corresponding output lanes are
    # never written back, so this is safe.

    out_row = pl.pallas_call(
        _critic_kernel,
        out_shape=jax.ShapeDtypeStruct((1, B), jnp.float32),
        grid=(grid_b,),
        in_specs=[
            pl.BlockSpec((block_b, D), lambda i: (i, 0)),          # x batch tile, full D
            pl.BlockSpec((H, D), lambda i: (0, 0)),                # w1 (fetched once, resident)
            pl.BlockSpec((H, 1), lambda i: (0, 0)),                # b1 column
            pl.BlockSpec((H, 1), lambda i: (0, 0)),                # w2 column
            pl.BlockSpec(memory_space=pltpu.MemorySpace.SMEM),     # b2 scalar
        ],
        out_specs=pl.BlockSpec((1, block_b), lambda i: (0, i)),    # lane-dense output row
        compiler_params=pltpu.CompilerParams(
            dimension_semantics=("parallel",),                     # v7x: 2 TCs split the batch
        ),
    )(x, w1, b1_c, w2_c, b2_s)

    # (1, B) lane-dense row -> (B, 1)
    return out_row.reshape(B, 1)


def init_params(key, state_dim, hidden=HIDDEN_LAYER_SIZE):
    """Deterministic init mirroring nn.Linear's U(-1/sqrt(fan_in), 1/sqrt(fan_in)).

    Weights are kept in PyTorch (out_features, in_features) layout."""
    k1, k2, k3, k4 = jax.random.split(key, 4)
    bound1 = 1.0 / (state_dim ** 0.5)
    bound2 = 1.0 / (hidden ** 0.5)
    w1 = jax.random.uniform(k1, (hidden, state_dim), jnp.float32, -bound1, bound1)
    b1 = jax.random.uniform(k2, (hidden,), jnp.float32, -bound1, bound1)
    w2 = jax.random.uniform(k3, (1, hidden), jnp.float32, -bound2, bound2)
    b2 = jax.random.uniform(k4, (1,), jnp.float32, -bound2, bound2)
    return w1, b1, w2, b2


if __name__ == "__main__":
    key = jax.random.PRNGKey(0)
    k_x, k_p, k_x2 = jax.random.split(key, 3)

    STATE_DIM = 48   # e.g. flattened Pensieve state (6 * 8)
    B = 2

    state = jax.random.normal(k_x, (B, STATE_DIM), jnp.float32)
    w1, b1, w2, b2 = init_params(k_p, STATE_DIM)
    params = prepare_critic_params(w1, b1, w2, b2)   # one-time weight prep

    fwd = jax.jit(critic_forward)
    out = jax.block_until_ready(fwd(state, params))

    def reference_bf16(x):
        # Matches the kernel's bf16 streaming of x / w1 with f32 accumulation.
        xb = x.astype(jnp.bfloat16).astype(jnp.float32)
        w1b = w1.astype(jnp.bfloat16).astype(jnp.float32)
        h = jnp.maximum(xb @ w1b.T + b1[None, :], 0.0)
        return h @ w2.T + b2[None, :]

    def reference_f32(x):
        h = jnp.maximum(x @ w1.T + b1[None, :], 0.0)
        return h @ w2.T + b2[None, :]

    assert out.shape == (B, 1)
    assert jnp.allclose(out, reference_bf16(state), atol=2e-3, rtol=2e-3)
    assert jnp.allclose(out, reference_f32(state), atol=5e-2, rtol=5e-2)

    # Secondary check: multi-tile grid with a partial boundary block
    # (B not a multiple of block_b, no batch padding anywhere).
    B2 = 300
    state2 = jax.random.normal(k_x2, (B2, STATE_DIM), jnp.float32)
    out2 = jax.block_until_ready(fwd(state2, params))
    assert out2.shape == (B2, 1)
    assert jnp.allclose(out2, reference_bf16(state2), atol=2e-3, rtol=2e-3)

    print("KERNEL_OK")
</pallas_src>

<mosaic_0001>
module attributes {stable_mosaic.version = 11 : i64} {
  func.func @_critic_kernel(%arg0: i32, %arg1: memref<128x48xbf16, #tpu.memory_space<vmem>>, %arg2: memref<256x48xbf16, #tpu.memory_space<vmem>>, %arg3: memref<256x1xf32, #tpu.memory_space<vmem>>, %arg4: memref<256x1xf32, #tpu.memory_space<vmem>>, %arg5: memref<1xf32, #tpu.memory_space<smem>>, %arg6: memref<1x128xf32, #tpu.memory_space<vmem>>) attributes {dimension_semantics = [#tpu.dimension_semantics<parallel>], iteration_bounds = array<i64: 1>, scalar_prefetch = 0 : i64, scratch_operands = 0 : i64, tpu.core_type = #tpu.core_type<tc>, window_params = [{transform_indices = @transform_0, window_bounds = array<i64: 128, 48>}, {pipeline_mode = #tpu.pipeline_mode<synchronous>, transform_indices = @transform_1, window_bounds = array<i64: 256, 48>}, {pipeline_mode = #tpu.pipeline_mode<synchronous>, transform_indices = @transform_2, window_bounds = array<i64: 256, 1>}, {pipeline_mode = #tpu.pipeline_mode<synchronous>, transform_indices = @transform_3, window_bounds = array<i64: 256, 1>}, {transform_indices = @transform_4, window_bounds = array<i64: 1>}, {transform_indices = @transform_5, window_bounds = array<i64: 1, 128>}]} {
    %c0 = arith.constant 0 : index
    %c0_0 = arith.constant 0 : index
    %0 = vector.load %arg2[%c0, %c0_0] : memref<256x48xbf16, #tpu.memory_space<vmem>>, vector<256x48xbf16>
    %c0_1 = arith.constant 0 : index
    %c0_2 = arith.constant 0 : index
    %1 = vector.load %arg1[%c0_1, %c0_2] : memref<128x48xbf16, #tpu.memory_space<vmem>>, vector<128x48xbf16>
    %cst = arith.constant dense<0.000000e+00> : vector<256x128xf32>
    %2 = tpu.matmul %0, %1, %cst {dimension_numbers = #tpu.dot_dimension_numbers<[1], [1], [0], [0], [0, 0, 1, 0], [], []>} : vector<256x48xbf16>, vector<128x48xbf16>, vector<256x128xf32> -> vector<256x128xf32>
    %c0_3 = arith.constant 0 : index
    %c0_4 = arith.constant 0 : index
    %3 = vector.load %arg3[%c0_3, %c0_4] : memref<256x1xf32, #tpu.memory_space<vmem>>, vector<256x1xf32>
    %4 = vector.broadcast %3 : vector<256x1xf32> to vector<256x128xf32>
    %5 = arith.addf %2, %4 : vector<256x128xf32>
    %cst_5 = arith.constant 0.000000e+00 : f32
    %6 = vector.broadcast %cst_5 : f32 to vector<256x128xf32>
    %7 = arith.maximumf %5, %6 : vector<256x128xf32>
    %c0_6 = arith.constant 0 : index
    %c0_7 = arith.constant 0 : index
    %8 = vector.load %arg4[%c0_6, %c0_7] : memref<256x1xf32, #tpu.memory_space<vmem>>, vector<256x1xf32>
    %9 = vector.broadcast %8 : vector<256x1xf32> to vector<256x128xf32>
    %10 = arith.mulf %7, %9 : vector<256x128xf32>
    %cst_8 = arith.constant dense<0.000000e+00> : vector<128xf32>
    %11 = vector.multi_reduction <add>, %10, %cst_8 [0] : vector<256x128xf32> to vector<128xf32>
    %12 = vector.shape_cast %11 : vector<128xf32> to vector<1x128xf32>
    %c0_9 = arith.constant 0 : index
    %13 = memref.load %arg5[%c0_9] : memref<1xf32, #tpu.memory_space<smem>>
    %14 = vector.broadcast %13 : f32 to vector<1x128xf32>
    %15 = arith.addf %12, %14 : vector<1x128xf32>
    %c0_10 = arith.constant 0 : index
    %c0_11 = arith.constant 0 : index
    %16 = vector.load %arg6[%c0_10, %c0_11] : memref<1x128xf32, #tpu.memory_space<vmem>>, vector<1x128xf32>
    tpu.vector_store %arg6[%c0_10, %c0_11], %15 {strides = array<i32>} : memref<1x128xf32, #tpu.memory_space<vmem>>, vector<1x128xf32>,
    return
  }
  func.func @transform_0(%arg0: i32) -> (i32, i32) {
    %c0_i32 = arith.constant 0 : i32
    %c0_i32_0 = arith.constant 0 : i32
    return %arg0, %c0_i32 : i32, i32
  }
  func.func @transform_1(%arg0: i32) -> (i32, i32) {
    %c0_i32 = arith.constant 0 : i32
    %c0_i32_0 = arith.constant 0 : i32
    %c0_i32_1 = arith.constant 0 : i32
    return %c0_i32, %c0_i32_0 : i32, i32
  }
  func.func @transform_2(%arg0: i32) -> (i32, i32) {
    %c0_i32 = arith.constant 0 : i32
    %c0_i32_0 = arith.constant 0 : i32
    %c0_i32_1 = arith.constant 0 : i32
    return %c0_i32, %c0_i32_0 : i32, i32
  }
  func.func @transform_3(%arg0: i32) -> (i32, i32) {
    %c0_i32 = arith.constant 0 : i32
    %c0_i32_0 = arith.constant 0 : i32
    %c0_i32_1 = arith.constant 0 : i32
    return %c0_i32, %c0_i32_0 : i32, i32
  }
  func.func @transform_4(%arg0: i32) -> i32 {
    %c0_i32 = arith.constant 0 : i32
    %c0_i32_0 = arith.constant 0 : i32
    return %c0_i32 : i32
  }
  func.func @transform_5(%arg0: i32) -> (i32, i32) {
    %c0_i32 = arith.constant 0 : i32
    %c0_i32_0 = arith.constant 0 : i32
    return %c0_i32, %arg0 : i32, i32
  }
}

</mosaic_0001>

<llo_original>
// kernel: critic_forward.1
$region0: #{critic_forward.1}
  #allocation0 [shape = 'u32[]', space=smem, size = 0x4, offset = 0x4, fixed_abs, tag = 'smem constant byte address 0x4 - core index']
  #allocation1 [shape = 'u32[144,128]{1,0:T(1,128)}', space=vmem, size = 0x12000, scoped, tag = 'internal scratch']
  #allocation2 [shape = 'f32[1]{0:T(128)S(6)}', space=smem, size = 0x200, scoped, tag = 'scoped memory for critic_forward.1']
  %s0 = inlined_call_operand.vmem [shape: bf16[2,48], index: 0, kind: input, shape index: {}]
  %s1 = inlined_call_operand.vmem [shape: bf16[256,48], index: 1, kind: input, shape index: {}]
  %s2 = inlined_call_operand.vmem [shape: f32[256,1], index: 2, kind: input, shape index: {}]
  %s3 = inlined_call_operand.vmem [shape: f32[256,1], index: 3, kind: input, shape index: {}]
  %s4 = inlined_call_operand.<no memory space> [shape: f32[1], index: 4, kind: input, shape index: {}]
  %s5 = inlined_call_operand.hbm [shape: f32[1,2], index: 5, kind: output, shape index: {}]
  %s6 = sld [smem:[#allocation0]]
  $region30: #{critic_forward.1} parent=0
    _
  %s8 = ssub.s32 1, %s6
  %s9 = scalar_select 0, %s8, %s6
  %10 = sst [smem:[#allocation2]] %s4
  $region1: #{critic_forward.1} parent=0
    #allocation3 [shape = 'u8[512]{0}', space=vmem, size = 0x400, scoped, tag = 'output window, operand 0, single buffered']
    #allocation4 [shape = 's32[1]{0}', space=sflag, size = 0x4, scoped, tag = 'scoped memory for critic_forward.1']
    %11 = vsyncpa [#allocation4], 0
    // Predicated region
    $region2: #{critic_forward.1} parent=1 // pred_check
      _
    $region3: #{critic_forward.1} parent=1 // pred_check_branch
      %13 = sbr.rel (0) target = $region5
    $region4: #{critic_forward.1} parent=1 // pred_region
      _
    $region5: #{critic_forward.1} parent=1 // pred_fallthru
      _
    // Predicated region
    $region6: #{critic_forward.1} parent=1 // pred_check
      _
    $region7: #{critic_forward.1} parent=1 // pred_check_branch
      %15 = sbr.rel (0) target = $region9
    $region8: #{critic_forward.1} parent=1 // pred_region
      _
    $region9: #{critic_forward.1} parent=1 // pred_fallthru
      _
    // Predicated region
    $region10: #{critic_forward.1} parent=1 // pred_check
      _
    $region11: #{critic_forward.1} parent=1 // pred_check_branch
      %17 = sbr.rel (0) target = $region13
    $region12: #{critic_forward.1} parent=1 // pred_region
      _
    $region13: #{critic_forward.1} parent=1 // pred_fallthru
      _
    // Predicated region
    $region14: #{critic_forward.1} parent=1 // pred_check
      _
    $region15: #{critic_forward.1} parent=1 // pred_check_branch
      %19 = sbr.rel (0) target = $region17
    $region16: #{critic_forward.1} parent=1 // pred_region
      _
    $region17: #{critic_forward.1} parent=1 // pred_fallthru
      _
    // Predicated region
    $region18: #{critic_forward.1} parent=1 // pred_check
      _
    $region19: #{critic_forward.1} parent=1 // pred_check_branch
      %21 = sbr.rel (0) target = $region21
    $region20: #{critic_forward.1} parent=1 // pred_region
      _
    $region21: #{critic_forward.1} parent=1 // pred_fallthru
      _
    %v23 = vld [vmem:[%s1] sm:$0xf]
    %v24 = vld [vmem:[%s1 + $0x4] sm:$0xf]
    %v25 = vld [vmem:[%s1 + $0x8] sm:$0xf]
    %v26 = vld [vmem:[%s1 + $0xc] sm:$0xf]
    %v27 = vld [vmem:[%s1 + $0x10] sm:$0xf]
    %v28 = vld [vmem:[%s1 + $0x14] sm:$0xf]
    %v29 = vld [vmem:[%s1 + $0x18] sm:$0xf]
    %v30 = vld [vmem:[%s1 + $0x1c] sm:$0xf]
    %v31 = vld [vmem:[%s1 + $0x20] sm:$0xf]
    %v32 = vld [vmem:[%s1 + $0x24] sm:$0xf]
    %v33 = vld [vmem:[%s1 + $0x28] sm:$0xf]
    %v34 = vld [vmem:[%s1 + $0x2c] sm:$0xf]
    %v35 = vld [vmem:[%s1 + $0x30] sm:$0xf]
    %v36 = vld [vmem:[%s1 + $0x34] sm:$0xf]
    %v37 = vld [vmem:[%s1 + $0x38] sm:$0xf]
    %v38 = vld [vmem:[%s1 + $0x3c] sm:$0xf]
    %v39 = vld [vmem:[%s1 + $0x40] sm:$0xf]
    %v40 = vld [vmem:[%s1 + $0x44] sm:$0xf]
    %v41 = vld [vmem:[%s1 + $0x48] sm:$0xf]
    %v42 = vld [vmem:[%s1 + $0x4c] sm:$0xf]
    %v43 = vld [vmem:[%s1 + $0x50] sm:$0xf]
    %v44 = vld [vmem:[%s1 + $0x54] sm:$0xf]
    %v45 = vld [vmem:[%s1 + $0x58] sm:$0xf]
    %v46 = vld [vmem:[%s1 + $0x5c] sm:$0xf]
    %v47 = vld [vmem:[%s1 + $0x60] sm:$0xf]
    %v48 = vld [vmem:[%s1 + $0x64] sm:$0xf]
    %v49 = vld [vmem:[%s1 + $0x68] sm:$0xf]
    %v50 = vld [vmem:[%s1 + $0x6c] sm:$0xf]
    %v51 = vld [vmem:[%s1 + $0x70] sm:$0xf]
    %v52 = vld [vmem:[%s1 + $0x74] sm:$0xf]
    %v53 = vld [vmem:[%s1 + $0x78] sm:$0xf]
    %v54 = vld [vmem:[%s1 + $0x7c] sm:$0xf]
    %v55 = vld [vmem:[%s0] sm:$0x1]
    %v56 = vld [vmem:[%s0 + $0x1] sm:$0x1]
    %v57 = vld [vmem:[%s0 + $0x2] sm:$0x1]
    %v58 = vld [vmem:[%s0 + $0x3] sm:$0x1]
    %v59 = vld [vmem:[%s0 + $0x4] sm:$0x1]
    %v60 = vld [vmem:[%s0 + $0x5] sm:$0x1]
    %v61 = vld [vmem:[%s0 + $0x6] sm:$0x1]
    %v62 = vld [vmem:[%s0 + $0x7] sm:$0x1]
    %v63 = vld [vmem:[%s0 + $0x8] sm:$0x1]
    %v64 = vld [vmem:[%s0 + $0x9] sm:$0x1]
    %v65 = vld [vmem:[%s0 + $0xa] sm:$0x1]
    %v66 = vld [vmem:[%s0 + $0xb] sm:$0x1]
    %v67 = vld [vmem:[%s0 + $0xc] sm:$0x1]
    %v68 = vld [vmem:[%s0 + $0xd] sm:$0x1]
    %v69 = vld [vmem:[%s0 + $0xe] sm:$0x1]
    %v70 = vld [vmem:[%s0 + $0xf] sm:$0x1]
    %v71 = vld [vmem:[%s0 + $0x10] sm:$0x1]
    %v72 = vld [vmem:[%s0 + $0x11] sm:$0x1]
    %v73 = vld [vmem:[%s0 + $0x12] sm:$0x1]
    %v74 = vld [vmem:[%s0 + $0x13] sm:$0x1]
    %v75 = vld [vmem:[%s0 + $0x14] sm:$0x1]
    %v76 = vld [vmem:[%s0 + $0x15] sm:$0x1]
    %v77 = vld [vmem:[%s0 + $0x16] sm:$0x1]
    %v78 = vld [vmem:[%s0 + $0x17] sm:$0x1]
    %v79 = vld [vmem:[%s0 + $0x18] sm:$0x1]
    %v80 = vld [vmem:[%s0 + $0x19] sm:$0x1]
    %v81 = vld [vmem:[%s0 + $0x1a] sm:$0x1]
    %v82 = vld [vmem:[%s0 + $0x1b] sm:$0x1]
    %v83 = vld [vmem:[%s0 + $0x1c] sm:$0x1]
    %v84 = vld [vmem:[%s0 + $0x1d] sm:$0x1]
    %v85 = vld [vmem:[%s0 + $0x1e] sm:$0x1]
    %v86 = vld [vmem:[%s0 + $0x1f] sm:$0x1]
    %v87 = vld [vmem:[%s0 + $0x20] sm:$0x1]
    %v88 = vld [vmem:[%s0 + $0x21] sm:$0x1]
    %v89 = vld [vmem:[%s0 + $0x22] sm:$0x1]
    %v90 = vld [vmem:[%s0 + $0x23] sm:$0x1]
    %v91 = vld [vmem:[%s0 + $0x24] sm:$0x1]
    %v92 = vld [vmem:[%s0 + $0x25] sm:$0x1]
    %v93 = vld [vmem:[%s0 + $0x26] sm:$0x1]
    %v94 = vld [vmem:[%s0 + $0x27] sm:$0x1]
    %v95 = vld [vmem:[%s0 + $0x28] sm:$0x1]
    %v96 = vld [vmem:[%s0 + $0x29] sm:$0x1]
    %v97 = vld [vmem:[%s0 + $0x2a] sm:$0x1]
    %v98 = vld [vmem:[%s0 + $0x2b] sm:$0x1]
    %v99 = vld [vmem:[%s0 + $0x2c] sm:$0x1]
    %v100 = vld [vmem:[%s0 + $0x2d] sm:$0x1]
    %v101 = vld [vmem:[%s0 + $0x2e] sm:$0x1]
    %v102 = vld [vmem:[%s0 + $0x2f] sm:$0x1]
    %v103 = vld [vmem:[%s0 + $0x30] sm:$0x1]
    %v104 = vld [vmem:[%s0 + $0x31] sm:$0x1]
    %v105 = vld [vmem:[%s0 + $0x32] sm:$0x1]
    %v106 = vld [vmem:[%s0 + $0x33] sm:$0x1]
    %v107 = vld [vmem:[%s0 + $0x34] sm:$0x1]
    %v108 = vld [vmem:[%s0 + $0x35] sm:$0x1]
    %v109 = vld [vmem:[%s0 + $0x36] sm:$0x1]
    %v110 = vld [vmem:[%s0 + $0x37] sm:$0x1]
    %v111 = vld [vmem:[%s0 + $0x38] sm:$0x1]
    %v112 = vld [vmem:[%s0 + $0x39] sm:$0x1]
    %v113 = vld [vmem:[%s0 + $0x3a] sm:$0x1]
    %v114 = vld [vmem:[%s0 + $0x3b] sm:$0x1]
    %v115 = vld [vmem:[%s0 + $0x3c] sm:$0x1]
    %v116 = vld [vmem:[%s0 + $0x3d] sm:$0x1]
    %v117 = vld [vmem:[%s0 + $0x3e] sm:$0x1]
    %v118 = vld [vmem:[%s0 + $0x3f] sm:$0x1]
    %v119 = vld [vmem:[%s2] sm:$0xff]
    %v120 = vld [vmem:[%s2 + $0x8] sm:$0xff]
    %v121 = vld [vmem:[%s2 + $0x10] sm:$0xff]
    %v122 = vld [vmem:[%s2 + $0x18] sm:$0xff]
    %v123 = vld [vmem:[%s2 + $0x20] sm:$0xff]
    %v124 = vld [vmem:[%s2 + $0x28] sm:$0xff]
    %v125 = vld [vmem:[%s2 + $0x30] sm:$0xff]
    %v126 = vld [vmem:[%s2 + $0x38] sm:$0xff]
    %v127 = vld [vmem:[%s2 + $0x40] sm:$0xff]
    %v128 = vld [vmem:[%s2 + $0x48] sm:$0xff]
    %v129 = vld [vmem:[%s2 + $0x50] sm:$0xff]
    %v130 = vld [vmem:[%s2 + $0x58] sm:$0xff]
    %v131 = vld [vmem:[%s2 + $0x60] sm:$0xff]
    %v132 = vld [vmem:[%s2 + $0x68] sm:$0xff]
    %v133 = vld [vmem:[%s2 + $0x70] sm:$0xff]
    %v134 = vld [vmem:[%s2 + $0x78] sm:$0xff]
    %v135 = vld [vmem:[%s2 + $0x80] sm:$0xff]
    %v136 = vld [vmem:[%s2 + $0x88] sm:$0xff]
    %v137 = vld [vmem:[%s2 + $0x90] sm:$0xff]
    %v138 = vld [vmem:[%s2 + $0x98] sm:$0xff]
    %v139 = vld [vmem:[%s2 + $0xa0] sm:$0xff]
    %v140 = vld [vmem:[%s2 + $0xa8] sm:$0xff]
    %v141 = vld [vmem:[%s2 + $0xb0] sm:$0xff]
    %v142 = vld [vmem:[%s2 + $0xb8] sm:$0xff]
    %v143 = vld [vmem:[%s2 + $0xc0] sm:$0xff]
    %v144 = vld [vmem:[%s2 + $0xc8] sm:$0xff]
    %v145 = vld [vmem:[%s2 + $0xd0] sm:$0xff]
    %v146 = vld [vmem:[%s2 + $0xd8] sm:$0xff]
    %v147 = vld [vmem:[%s2 + $0xe0] sm:$0xff]
    %v148 = vld [vmem:[%s2 + $0xe8] sm:$0xff]
    %v149 = vld [vmem:[%s2 + $0xf0] sm:$0xff]
    %v150 = vld [vmem:[%s2 + $0xf8] sm:$0xff]
    %152 = vset.pattern.permute.xlu0 0
    %153 = vperm.xlu0 %152, %v119
    %v154 = vpop.permute.xlu0 %153
    %157 = vset.pattern.permute.xlu0 0
    %158 = vperm.xlu0 %157, %v120
    %v159 = vpop.permute.xlu0 %158
    %162 = vset.pattern.permute.xlu0 0
    %163 = vperm.xlu0 %162, %v121
    %v164 = vpop.permute.xlu0 %163
    %167 = vset.pattern.permute.xlu0 0
    %168 = vperm.xlu0 %167, %v122
    %v169 = vpop.permute.xlu0 %168
    %172 = vset.pattern.permute.xlu0 0
    %173 = vperm.xlu0 %172, %v123
    %v174 = vpop.permute.xlu0 %173
    %177 = vset.pattern.permute.xlu0 0
    %178 = vperm.xlu0 %177, %v124
    %v179 = vpop.permute.xlu0 %178
    %182 = vset.pattern.permute.xlu0 0
    %183 = vperm.xlu0 %182, %v125
    %v184 = vpop.permute.xlu0 %183
    %187 = vset.pattern.permute.xlu0 0
    %188 = vperm.xlu0 %187, %v126
    %v189 = vpop.permute.xlu0 %188
    %192 = vset.pattern.permute.xlu0 0
    %193 = vperm.xlu0 %192, %v127
    %v194 = vpop.permute.xlu0 %193
    %197 = vset.pattern.permute.xlu0 0
    %198 = vperm.xlu0 %197, %v128
    %v199 = vpop.permute.xlu0 %198
    %202 = vset.pattern.permute.xlu0 0
    %203 = vperm.xlu0 %202, %v129
    %v204 = vpop.permute.xlu0 %203
    %207 = vset.pattern.permute.xlu0 0
    %208 = vperm.xlu0 %207, %v130
    %v209 = vpop.permute.xlu0 %208
    %212 = vset.pattern.permute.xlu0 0
    %213 = vperm.xlu0 %212, %v131
    %v214 = vpop.permute.xlu0 %213
    %217 = vset.pattern.permute.xlu0 0
    %218 = vperm.xlu0 %217, %v132
    %v219 = vpop.permute.xlu0 %218
    %222 = vset.pattern.permute.xlu0 0
    %223 = vperm.xlu0 %222, %v133
    %v224 = vpop.permute.xlu0 %223
    %227 = vset.pattern.permute.xlu0 0
    %228 = vperm.xlu0 %227, %v134
    %v229 = vpop.permute.xlu0 %228
    %232 = vset.pattern.permute.xlu0 0
    %233 = vperm.xlu0 %232, %v135
    %v234 = vpop.permute.xlu0 %233
    %237 = vset.pattern.permute.xlu0 0
    %238 = vperm.xlu0 %237, %v136
    %v239 = vpop.permute.xlu0 %238
    %242 = vset.pattern.permute.xlu0 0
    %243 = vperm.xlu0 %242, %v137
    %v244 = vpop.permute.xlu0 %243
    %247 = vset.pattern.permute.xlu0 0
    %248 = vperm.xlu0 %247, %v138
    %v249 = vpop.permute.xlu0 %248
    %252 = vset.pattern.permute.xlu0 0
    %253 = vperm.xlu0 %252, %v139
    %v254 = vpop.permute.xlu0 %253
    %257 = vset.pattern.permute.xlu0 0
    %258 = vperm.xlu0 %257, %v140
    %v259 = vpop.permute.xlu0 %258
    %262 = vset.pattern.permute.xlu0 0
    %263 = vperm.xlu0 %262, %v141
    %v264 = vpop.permute.xlu0 %263
    %267 = vset.pattern.permute.xlu0 0
    %268 = vperm.xlu0 %267, %v142
    %v269 = vpop.permute.xlu0 %268
    %272 = vset.pattern.permute.xlu0 0
    %273 = vperm.xlu0 %272, %v143
    %v274 = vpop.permute.xlu0 %273
    %277 = vset.pattern.permute.xlu0 0
    %278 = vperm.xlu0 %277, %v144
    %v279 = vpop.permute.xlu0 %278
    %282 = vset.pattern.permute.xlu0 0
    %283 = vperm.xlu0 %282, %v145
    %v284 = vpop.permute.xlu0 %283
    %287 = vset.pattern.permute.xlu0 0
    %288 = vperm.xlu0 %287, %v146
    %v289 = vpop.permute.xlu0 %288
    %292 = vset.pattern.permute.xlu0 0
    %293 = vperm.xlu0 %292, %v147
    %v294 = vpop.permute.xlu0 %293
    %297 = vset.pattern.permute.xlu0 0
    %298 = vperm.xlu0 %297, %v148
    %v299 = vpop.permute.xlu0 %298
    %302 = vset.pattern.permute.xlu0 0
    %303 = vperm.xlu0 %302, %v149
    %v304 = vpop.permute.xlu0 %303
    %307 = vset.pattern.permute.xlu0 0
    %308 = vperm.xlu0 %307, %v150
    %v309 = vpop.permute.xlu0 %308
    %v343 = vunpack.c.l.b16 %v23
    %v344 = vunpack.c.l.b16 %v24
    %v345 = vunpack.c.l.b16 %v25
    %v346 = vunpack.c.l.b16 %v26
    %v347 = vunpack.c.l.b16 %v27
    %v348 = vunpack.c.l.b16 %v28
    %v349 = vunpack.c.l.b16 %v29
    %v350 = vunpack.c.l.b16 %v30
    %v351 = vunpack.c.l.b16 %v31
    %v352 = vunpack.c.l.b16 %v32
    %v353 = vunpack.c.l.b16 %v33
    %v354 = vunpack.c.l.b16 %v34
    %v355 = vunpack.c.l.b16 %v35
    %v356 = vunpack.c.l.b16 %v36
    %v357 = vunpack.c.l.b16 %v37
    %v358 = vunpack.c.l.b16 %v38
    %v359 = vunpack.c.l.b16 %v39
    %v360 = vunpack.c.l.b16 %v40
    %v361 = vunpack.c.l.b16 %v41
    %v362 = vunpack.c.l.b16 %v42
    %v363 = vunpack.c.l.b16 %v43
    %v364 = vunpack.c.l.b16 %v44
    %v365 = vunpack.c.l.b16 %v45
    %v366 = vunpack.c.l.b16 %v46
    %v367 = vunpack.c.l.b16 %v47
    %v368 = vunpack.c.l.b16 %v48
    %v369 = vunpack.c.l.b16 %v49
    %v370 = vunpack.c.l.b16 %v50
    %v371 = vunpack.c.l.b16 %v51
    %v372 = vunpack.c.l.b16 %v52
    %v373 = vunpack.c.l.b16 %v53
    %v374 = vunpack.c.l.b16 %v54
    %v375 = vpack.c.b16 %v344, %v343
    %v376 = vpack.c.b16 %v346, %v345
    %v377 = vpack.c.b16 %v348, %v347
    %v378 = vpack.c.b16 %v350, %v349
    %v379 = vpack.c.b16 %v352, %v351
    %v380 = vpack.c.b16 %v354, %v353
    %v381 = vpack.c.b16 %v356, %v355
    %v382 = vpack.c.b16 %v358, %v357
    %v383 = vpack.c.b16 %v360, %v359
    %v384 = vpack.c.b16 %v362, %v361
    %v385 = vpack.c.b16 %v364, %v363
    %v386 = vpack.c.b16 %v366, %v365
    %v387 = vpack.c.b16 %v368, %v367
    %v388 = vpack.c.b16 %v370, %v369
    %v389 = vpack.c.b16 %v372, %v371
    %v390 = vpack.c.b16 %v374, %v373
    %v455 = vcombine.low %v55, %v56
    %v456 = vcombine.low %v57, %v58
    %v457 = vcombine.low %v59, %v60
    %v458 = vcombine.low %v61, %v62
    %v460 = vunpack.c.l.s4 1966171168
    %v461 = vunpack.c.0.s8 %v460
    %v462 = vlaneseq
    %v463 = vshrl.u32 %v462, 7
    %v464 = vsub.s32 %v461, %v463
    %v465 = vrot.slane %v455, %v464
    %v467 = vunpack.c.l.s4 1966171168
    %v468 = vunpack.c.0.s8 %v467
    %v469 = vlaneseq
    %v470 = vshrl.u32 %v469, 7
    %v471 = vsub.s32 %v468, %v470
    %v472 = vrot.slane %v456, %v471
    %v474 = vunpack.c.l.s4 1966171168
    %v475 = vunpack.c.0.s8 %v474
    %v476 = vlaneseq
    %v477 = vshrl.u32 %v476, 7
    %v478 = vsub.s32 %v475, %v477
    %v479 = vrot.slane %v457, %v478
    %v481 = vunpack.c.l.s4 1966171168
    %v482 = vunpack.c.0.s8 %v481
    %v483 = vlaneseq
    %v484 = vshrl.u32 %v483, 7
    %v485 = vsub.s32 %v482, %v484
    %v486 = vrot.slane %v458, %v485
    %v487 = vcombine.low %v465, %v472
    %v488 = vcombine.low %v479, %v486
    %v490 = vunpack.c.l.s4 1966171168
    %v491 = vunpack.c.0.s8 %v490
    %v492 = vlaneseq
    %v493 = vshrl.u32 %v492, 7
    %v494 = vsub.s32 %v491, %v493
    %v495 = vrot.slane %v487, %v494
    %v497 = vunpack.c.l.s4 1966171168
    %v498 = vunpack.c.0.s8 %v497
    %v499 = vlaneseq
    %v500 = vshrl.u32 %v499, 7
    %v501 = vsub.s32 %v498, %v500
    %v502 = vrot.slane %v488, %v501
    %v503 = vcombine.low %v495, %v502
    %v504 = vcombine.low %v63, %v64
    %v505 = vcombine.low %v65, %v66
    %v506 = vcombine.low %v67, %v68
    %v507 = vcombine.low %v69, %v70
    %v509 = vunpack.c.l.s4 1966171168
    %v510 = vunpack.c.0.s8 %v509
    %v511 = vlaneseq
    %v512 = vshrl.u32 %v511, 7
    %v513 = vsub.s32 %v510, %v512
    %v514 = vrot.slane %v504, %v513
    %v516 = vunpack.c.l.s4 1966171168
    %v517 = vunpack.c.0.s8 %v516
    %v518 = vlaneseq
    %v519 = vshrl.u32 %v518, 7
    %v520 = vsub.s32 %v517, %v519
    %v521 = vrot.slane %v505, %v520
    %v523 = vunpack.c.l.s4 1966171168
    %v524 = vunpack.c.0.s8 %v523
    %v525 = vlaneseq
    %v526 = vshrl.u32 %v525, 7
    %v527 = vsub.s32 %v524, %v526
    %v528 = vrot.slane %v506, %v527
    %v530 = vunpack.c.l.s4 1966171168
    %v531 = vunpack.c.0.s8 %v530
    %v532 = vlaneseq
    %v533 = vshrl.u32 %v532, 7
    %v534 = vsub.s32 %v531, %v533
    %v535 = vrot.slane %v507, %v534
    %v536 = vcombine.low %v514, %v521
    %v537 = vcombine.low %v528, %v535
    %v539 = vunpack.c.l.s4 1966171168
    %v540 = vunpack.c.0.s8 %v539
    %v541 = vlaneseq
    %v542 = vshrl.u32 %v541, 7
    %v543 = vsub.s32 %v540, %v542
    %v544 = vrot.slane %v536, %v543
    %v546 = vunpack.c.l.s4 1966171168
    %v547 = vunpack.c.0.s8 %v546
    %v548 = vlaneseq
    %v549 = vshrl.u32 %v548, 7
    %v550 = vsub.s32 %v547, %v549
    %v551 = vrot.slane %v537, %v550
    %v552 = vcombine.low %v544, %v551
    %v553 = vcombine.low %v71, %v72
    %v554 = vcombine.low %v73, %v74
    %v555 = vcombine.low %v75, %v76
    %v556 = vcombine.low %v77, %v78
    %v558 = vunpack.c.l.s4 1966171168
    %v559 = vunpack.c.0.s8 %v558
    %v560 = vlaneseq
    %v561 = vshrl.u32 %v560, 7
    %v562 = vsub.s32 %v559, %v561
    %v563 = vrot.slane %v553, %v562
    %v565 = vunpack.c.l.s4 1966171168
    %v566 = vunpack.c.0.s8 %v565
    %v567 = vlaneseq
    %v568 = vshrl.u32 %v567, 7
    %v569 = vsub.s32 %v566, %v568
    %v570 = vrot.slane %v554, %v569
    %v572 = vunpack.c.l.s4 1966171168
    %v573 = vunpack.c.0.s8 %v572
    %v574 = vlaneseq
    %v575 = vshrl.u32 %v574, 7
    %v576 = vsub.s32 %v573, %v575
    %v577 = vrot.slane %v555, %v576
    %v579 = vunpack.c.l.s4 1966171168
    %v580 = vunpack.c.0.s8 %v579
    %v581 = vlaneseq
    %v582 = vshrl.u32 %v581, 7
    %v583 = vsub.s32 %v580, %v582
    %v584 = vrot.slane %v556, %v583
    %v585 = vcombine.low %v563, %v570
    %v586 = vcombine.low %v577, %v584
    %v588 = vunpack.c.l.s4 1966171168
    %v589 = vunpack.c.0.s8 %v588
    %v590 = vlaneseq
    %v591 = vshrl.u32 %v590, 7
    %v592 = vsub.s32 %v589, %v591
    %v593 = vrot.slane %v585, %v592
    %v595 = vunpack.c.l.s4 1966171168
    %v596 = vunpack.c.0.s8 %v595
    %v597 = vlaneseq
    %v598 = vshrl.u32 %v597, 7
    %v599 = vsub.s32 %v596, %v598
    %v600 = vrot.slane %v586, %v599
    %v601 = vcombine.low %v593, %v600
    %v602 = vcombine.low %v79, %v80
    %v603 = vcombine.low %v81, %v82
    %v604 = vcombine.low %v83, %v84
    %v605 = vcombine.low %v85, %v86
    %v607 = vunpack.c.l.s4 1966171168
    %v608 = vunpack.c.0.s8 %v607
    %v609 = vlaneseq
    %v610 = vshrl.u32 %v609, 7
    %v611 = vsub.s32 %v608, %v610
    %v612 = vrot.slane %v602, %v611
    %v614 = vunpack.c.l.s4 1966171168
    %v615 = vunpack.c.0.s8 %v614
    %v616 = vlaneseq
    %v617 = vshrl.u32 %v616, 7
    %v618 = vsub.s32 %v615, %v617
    %v619 = vrot.slane %v603, %v618
    %v621 = vunpack.c.l.s4 1966171168
    %v622 = vunpack.c.0.s8 %v621
    %v623 = vlaneseq
    %v624 = vshrl.u32 %v623, 7
    %v625 = vsub.s32 %v622, %v624
    %v626 = vrot.slane %v604, %v625
    %v628 = vunpack.c.l.s4 1966171168
    %v629 = vunpack.c.0.s8 %v628
    %v630 = vlaneseq
    %v631 = vshrl.u32 %v630, 7
    %v632 = vsub.s32 %v629, %v631
    %v633 = vrot.slane %v605, %v632
    %v634 = vcombine.low %v612, %v619
    %v635 = vcombine.low %v626, %v633
    %v637 = vunpack.c.l.s4 1966171168
    %v638 = vunpack.c.0.s8 %v637
    %v639 = vlaneseq
    %v640 = vshrl.u32 %v639, 7
    %v641 = vsub.s32 %v638, %v640
    %v642 = vrot.slane %v634, %v641
    %v644 = vunpack.c.l.s4 1966171168
    %v645 = vunpack.c.0.s8 %v644
    %v646 = vlaneseq
    %v647 = vshrl.u32 %v646, 7
    %v648 = vsub.s32 %v645, %v647
    %v649 = vrot.slane %v635, %v648
    %v650 = vcombine.low %v642, %v649
    %v651 = vcombine.low %v87, %v88
    %v652 = vcombine.low %v89, %v90
    %v653 = vcombine.low %v91, %v92
    %v654 = vcombine.low %v93, %v94
    %v656 = vunpack.c.l.s4 1966171168
    %v657 = vunpack.c.0.s8 %v656
    %v658 = vlaneseq
    %v659 = vshrl.u32 %v658, 7
    %v660 = vsub.s32 %v657, %v659
    %v661 = vrot.slane %v651, %v660
    %v663 = vunpack.c.l.s4 1966171168
    %v664 = vunpack.c.0.s8 %v663
    %v665 = vlaneseq
    %v666 = vshrl.u32 %v665, 7
    %v667 = vsub.s32 %v664, %v666
    %v668 = vrot.slane %v652, %v667
    %v670 = vunpack.c.l.s4 1966171168
    %v671 = vunpack.c.0.s8 %v670
    %v672 = vlaneseq
    %v673 = vshrl.u32 %v672, 7
    %v674 = vsub.s32 %v671, %v673
    %v675 = vrot.slane %v653, %v674
    %v677 = vunpack.c.l.s4 1966171168
    %v678 = vunpack.c.0.s8 %v677
    %v679 = vlaneseq
    %v680 = vshrl.u32 %v679, 7
    %v681 = vsub.s32 %v678, %v680
    %v682 = vrot.slane %v654, %v681
    %v683 = vcombine.low %v661, %v668
    %v684 = vcombine.low %v675, %v682
    %v686 = vunpack.c.l.s4 1966171168
    %v687 = vunpack.c.0.s8 %v686
    %v688 = vlaneseq
    %v689 = vshrl.u32 %v688, 7
    %v690 = vsub.s32 %v687, %v689
    %v691 = vrot.slane %v683, %v690
    %v693 = vunpack.c.l.s4 1966171168
    %v694 = vunpack.c.0.s8 %v693
    %v695 = vlaneseq
    %v696 = vshrl.u32 %v695, 7
    %v697 = vsub.s32 %v694, %v696
    %v698 = vrot.slane %v684, %v697
    %v699 = vcombine.low %v691, %v698
    %v700 = vcombine.low %v95, %v96
    %v701 = vcombine.low %v97, %v98
    %v702 = vcombine.low %v99, %v100
    %v703 = vcombine.low %v101, %v102
    %v705 = vunpack.c.l.s4 1966171168
    %v706 = vunpack.c.0.s8 %v705
    %v707 = vlaneseq
    %v708 = vshrl.u32 %v707, 7
    %v709 = vsub.s32 %v706, %v708
    %v710 = vrot.slane %v700, %v709
    %v712 = vunpack.c.l.s4 1966171168
    %v713 = vunpack.c.0.s8 %v712
    %v714 = vlaneseq
    %v715 = vshrl.u32 %v714, 7
    %v716 = vsub.s32 %v713, %v715
    %v717 = vrot.slane %v701, %v716
    %v719 = vunpack.c.l.s4 1966171168
    %v720 = vunpack.c.0.s8 %v719
    %v721 = vlaneseq
    %v722 = vshrl.u32 %v721, 7
    %v723 = vsub.s32 %v720, %v722
    %v724 = vrot.slane %v702, %v723
    %v726 = vunpack.c.l.s4 1966171168
    %v727 = vunpack.c.0.s8 %v726
    %v728 = vlaneseq
    %v729 = vshrl.u32 %v728, 7
    %v730 = vsub.s32 %v727, %v729
    %v731 = vrot.slane %v703, %v730
    %v732 = vcombine.low %v710, %v717
    %v733 = vcombine.low %v724, %v731
    %v735 = vunpack.c.l.s4 1966171168
    %v736 = vunpack.c.0.s8 %v735
    %v737 = vlaneseq
    %v738 = vshrl.u32 %v737, 7
    %v739 = vsub.s32 %v736, %v738
    %v740 = vrot.slane %v732, %v739
    %v742 = vunpack.c.l.s4 1966171168
    %v743 = vunpack.c.0.s8 %v742
    %v744 = vlaneseq
    %v745 = vshrl.u32 %v744, 7
    %v746 = vsub.s32 %v743, %v745
    %v747 = vrot.slane %v733, %v746
    %v748 = vcombine.low %v740, %v747
    %v749 = vcombine.low %v103, %v104
    %v750 = vcombine.low %v105, %v106
    %v751 = vcombine.low %v107, %v108
    %v752 = vcombine.low %v109, %v110
    %v754 = vunpack.c.l.s4 1966171168
    %v755 = vunpack.c.0.s8 %v754
    %v756 = vlaneseq
    %v757 = vshrl.u32 %v756, 7
    %v758 = vsub.s32 %v755, %v757
    %v759 = vrot.slane %v749, %v758
    %v761 = vunpack.c.l.s4 1966171168
    %v762 = vunpack.c.0.s8 %v761
    %v763 = vlaneseq
    %v764 = vshrl.u32 %v763, 7
    %v765 = vsub.s32 %v762, %v764
    %v766 = vrot.slane %v750, %v765
    %v768 = vunpack.c.l.s4 1966171168
    %v769 = vunpack.c.0.s8 %v768
    %v770 = vlaneseq
    %v771 = vshrl.u32 %v770, 7
    %v772 = vsub.s32 %v769, %v771
    %v773 = vrot.slane %v751, %v772
    %v775 = vunpack.c.l.s4 1966171168
    %v776 = vunpack.c.0.s8 %v775
    %v777 = vlaneseq
    %v778 = vshrl.u32 %v777, 7
    %v779 = vsub.s32 %v776, %v778
    %v780 = vrot.slane %v752, %v779
    %v781 = vcombine.low %v759, %v766
    %v782 = vcombine.low %v773, %v780
    %v784 = vunpack.c.l.s4 1966171168
    %v785 = vunpack.c.0.s8 %v784
    %v786 = vlaneseq
    %v787 = vshrl.u32 %v786, 7
    %v788 = vsub.s32 %v785, %v787
    %v789 = vrot.slane %v781, %v788
    %v791 = vunpack.c.l.s4 1966171168
    %v792 = vunpack.c.0.s8 %v791
    %v793 = vlaneseq
    %v794 = vshrl.u32 %v793, 7
    %v795 = vsub.s32 %v792, %v794
    %v796 = vrot.slane %v782, %v795
    %v797 = vcombine.low %v789, %v796
    %v798 = vcombine.low %v111, %v112
    %v799 = vcombine.low %v113, %v114
    %v800 = vcombine.low %v115, %v116
    %v801 = vcombine.low %v117, %v118
    %v803 = vunpack.c.l.s4 1966171168
    %v804 = vunpack.c.0.s8 %v803
    %v805 = vlaneseq
    %v806 = vshrl.u32 %v805, 7
    %v807 = vsub.s32 %v804, %v806
    %v808 = vrot.slane %v798, %v807
    %v810 = vunpack.c.l.s4 1966171168
    %v811 = vunpack.c.0.s8 %v810
    %v812 = vlaneseq
    %v813 = vshrl.u32 %v812, 7
    %v814 = vsub.s32 %v811, %v813
    %v815 = vrot.slane %v799, %v814
    %v817 = vunpack.c.l.s4 1966171168
    %v818 = vunpack.c.0.s8 %v817
    %v819 = vlaneseq
    %v820 = vshrl.u32 %v819, 7
    %v821 = vsub.s32 %v818, %v820
    %v822 = vrot.slane %v800, %v821
    %v824 = vunpack.c.l.s4 1966171168
    %v825 = vunpack.c.0.s8 %v824
    %v826 = vlaneseq
    %v827 = vshrl.u32 %v826, 7
    %v828 = vsub.s32 %v825, %v827
    %v829 = vrot.slane %v801, %v828
    %v830 = vcombine.low %v808, %v815
    %v831 = vcombine.low %v822, %v829
    %v833 = vunpack.c.l.s4 1966171168
    %v834 = vunpack.c.0.s8 %v833
    %v835 = vlaneseq
    %v836 = vshrl.u32 %v835, 7
    %v837 = vsub.s32 %v834, %v836
    %v838 = vrot.slane %v830, %v837
    %v840 = vunpack.c.l.s4 1966171168
    %v841 = vunpack.c.0.s8 %v840
    %v842 = vlaneseq
    %v843 = vshrl.u32 %v842, 7
    %v844 = vsub.s32 %v841, %v843
    %v845 = vrot.slane %v831, %v844
    %v846 = vcombine.low %v838, %v845
    %vm847 = vcmask 392192
    %v849 = vsel %vm847, %v375, 0
    %v852 = vsel %vm847, %v376, 0
    %v855 = vsel %vm847, %v377, 0
    %v858 = vsel %vm847, %v378, 0
    %v861 = vsel %vm847, %v379, 0
    %v864 = vsel %vm847, %v380, 0
    %v867 = vsel %vm847, %v381, 0
    %v870 = vsel %vm847, %v382, 0
    %v873 = vsel %vm847, %v383, 0
    %v876 = vsel %vm847, %v384, 0
    %v879 = vsel %vm847, %v385, 0
    %v882 = vsel %vm847, %v386, 0
    %v885 = vsel %vm847, %v387, 0
    %v888 = vsel %vm847, %v388, 0
    %v891 = vsel %vm847, %v389, 0
    %v894 = vsel %vm847, %v390, 0
    %v897 = vsel %vm847, %v503, 0
    %v900 = vsel %vm847, %v552, 0
    %v903 = vsel %vm847, %v601, 0
    %v906 = vsel %vm847, %v650, 0
    %v909 = vsel %vm847, %v699, 0
    %v912 = vsel %vm847, %v748, 0
    %v915 = vsel %vm847, %v797, 0
    %v918 = vsel %vm847, %v846, 0
    %920 = vmatprep.subr.bf16.mxu0 0
    %921 = vmatpush1.bf16.xpose.msra.mxu0 %v897
    %922 = vmatprep.subr.bf16.mxu0 0
    %923 = vmatpush1.bf16.xpose.msra.mxu0 %v900
    %924 = vmatprep.subr.bf16.mxu0 0
    %925 = vmatpush1.bf16.xpose.msra.mxu0 %v903
    %926 = vmatprep.subr.bf16.mxu0 0
    %927 = vmatpush1.bf16.xpose.msra.mxu0 %v906
    %928 = vmatprep.subr.bf16.mxu0 0
    %929 = vmatpush1.bf16.xpose.msra.mxu0 %v909
    %930 = vmatprep.subr.bf16.mxu0 0
    %931 = vmatpush1.bf16.xpose.msra.mxu0 %v912
    %932 = vmatprep.subr.bf16.mxu0 0
    %933 = vmatpush1.bf16.xpose.msra.mxu0 %v915
    %934 = vmatprep.subr.bf16.mxu0 0
    %935 = vmatpush1.bf16.xpose.msra.mxu0 %v918
    %936 = vmatprep.subr.bf16.mxu0 0
    %937 = vmatpush1.bf16.xpose.msra.mxu0 0
    %938 = vmatprep.subr.bf16.mxu0 0
    %939 = vmatpush1.bf16.xpose.msra.mxu0 0
    %940 = vmatprep.subr.bf16.mxu0 0
    %941 = vmatpush1.bf16.xpose.msra.mxu0 0
    %942 = vmatprep.subr.bf16.mxu0 0
    %943 = vmatpush1.bf16.xpose.msra.mxu0 0
    %944 = vmatprep.subr.bf16.mxu0 0
    %945 = vmatpush1.bf16.xpose.msra.mxu0 0
    %946 = vmatprep.subr.bf16.mxu0 0
    %947 = vmatpush1.bf16.xpose.msra.mxu0 0
    %948 = vmatprep.subr.bf16.mxu0 0
    %949 = vmatpush1.bf16.xpose.msra.mxu0 0
    %950 = vmatprep.subr.bf16.mxu0 0
    %951 = vmatpush1.bf16.xpose.msra.mxu0 0
    %952 = vmatprep.mubr.bf16.mxu0 0
    %953 = vmatmul.mubr.bf16.gmra.mrb[0].mxu0 %v849
    %v954 = vpop.f32.mrb[0].mxu0
    %v955 = vadd.f32 %v154, %v954
    %v956 = vpop.f32.mrb[0].mxu0
    %v957 = vpop.f32.mrb[0].mxu0
    %v958 = vadd.f32 %v159, %v957
    %v959 = vpop.f32.mrb[0].mxu0
    %960 = vmatprep.mubr.bf16.mxu0 0
    %961 = vmatmul.mubr.bf16.gmra.mrb[0].mxu0 %v852
    %v962 = vpop.f32.mrb[0].mxu0
    %v963 = vadd.f32 %v164, %v962
    %v964 = vpop.f32.mrb[0].mxu0
    %v965 = vpop.f32.mrb[0].mxu0
    %v966 = vadd.f32 %v169, %v965
    %v967 = vpop.f32.mrb[0].mxu0
    %968 = vmatprep.mubr.bf16.mxu0 0
    %969 = vmatmul.mubr.bf16.gmra.mrb[0].mxu0 %v855
    %v970 = vpop.f32.mrb[0].mxu0
    %v971 = vadd.f32 %v174, %v970
    %v972 = vpop.f32.mrb[0].mxu0
    %v973 = vpop.f32.mrb[0].mxu0
    %v974 = vadd.f32 %v179, %v973
    %v975 = vpop.f32.mrb[0].mxu0
    %976 = vmatprep.mubr.bf16.mxu0 0
    %977 = vmatmul.mubr.bf16.gmra.mrb[0].mxu0 %v858
    %v978 = vpop.f32.mrb[0].mxu0
    %v979 = vadd.f32 %v184, %v978
    %v980 = vpop.f32.mrb[0].mxu0
    %v981 = vpop.f32.mrb[0].mxu0
    %v982 = vadd.f32 %v189, %v981
    %v983 = vpop.f32.mrb[0].mxu0
    %984 = vmatprep.mubr.bf16.mxu0 0
    %985 = vmatmul.mubr.bf16.gmra.mrb[0].mxu0 %v861
    %v986 = vpop.f32.mrb[0].mxu0
    %v987 = vadd.f32 %v194, %v986
    %v988 = vpop.f32.mrb[0].mxu0
    %v989 = vpop.f32.mrb[0].mxu0
    %v990 = vadd.f32 %v199, %v989
    %v991 = vpop.f32.mrb[0].mxu0
    %992 = vmatprep.mubr.bf16.mxu0 0
    %993 = vmatmul.mubr.bf16.gmra.mrb[0].mxu0 %v864
    %v994 = vpop.f32.mrb[0].mxu0
    %v995 = vadd.f32 %v204, %v994
    %v996 = vpop.f32.mrb[0].mxu0
    %v997 = vpop.f32.mrb[0].mxu0
    %v998 = vadd.f32 %v209, %v997
    %v999 = vpop.f32.mrb[0].mxu0
    %1000 = vmatprep.mubr.bf16.mxu0 0
    %1001 = vmatmul.mubr.bf16.gmra.mrb[0].mxu0 %v867
    %v1002 = vpop.f32.mrb[0].mxu0
    %v1003 = vadd.f32 %v214, %v1002
    %v1004 = vpop.f32.mrb[0].mxu0
    %v1005 = vpop.f32.mrb[0].mxu0
    %v1006 = vadd.f32 %v219, %v1005
    %v1007 = vpop.f32.mrb[0].mxu0
    %1008 = vmatprep.mubr.bf16.mxu0 0
    %1009 = vmatmul.mubr.bf16.gmra.mrb[0].mxu0 %v870
    %v1010 = vpop.f32.mrb[0].mxu0
    %v1011 = vadd.f32 %v224, %v1010
    %v1012 = vpop.f32.mrb[0].mxu0
    %v1013 = vpop.f32.mrb[0].mxu0
    %v1014 = vadd.f32 %v229, %v1013
    %v1015 = vpop.f32.mrb[0].mxu0
    %1016 = vmatprep.mubr.bf16.mxu0 0
    %1017 = vmatmul.mubr.bf16.gmra.mrb[0].mxu0 %v873
    %v1018 = vpop.f32.mrb[0].mxu0
    %v1019 = vadd.f32 %v234, %v1018
    %v1020 = vpop.f32.mrb[0].mxu0
    %v1021 = vpop.f32.mrb[0].mxu0
    %v1022 = vadd.f32 %v239, %v1021
    %v1023 = vpop.f32.mrb[0].mxu0
    %1024 = vmatprep.mubr.bf16.mxu0 0
    %1025 = vmatmul.mubr.bf16.gmra.mrb[0].mxu0 %v876
    %v1026 = vpop.f32.mrb[0].mxu0
    %v1027 = vadd.f32 %v244, %v1026
    %v1028 = vpop.f32.mrb[0].mxu0
    %v1029 = vpop.f32.mrb[0].mxu0
    %v1030 = vadd.f32 %v249, %v1029
    %v1031 = vpop.f32.mrb[0].mxu0
    %1032 = vmatprep.mubr.bf16.mxu0 0
    %1033 = vmatmul.mubr.bf16.gmra.mrb[0].mxu0 %v879
    %v1034 = vpop.f32.mrb[0].mxu0
    %v1035 = vadd.f32 %v254, %v1034
    %v1036 = vpop.f32.mrb[0].mxu0
    %v1037 = vpop.f32.mrb[0].mxu0
    %v1038 = vadd.f32 %v259, %v1037
    %v1039 = vpop.f32.mrb[0].mxu0
    %1040 = vmatprep.mubr.bf16.mxu0 0
    %1041 = vmatmul.mubr.bf16.gmra.mrb[0].mxu0 %v882
    %v1042 = vpop.f32.mrb[0].mxu0
    %v1043 = vadd.f32 %v264, %v1042
    %v1044 = vpop.f32.mrb[0].mxu0
    %v1045 = vpop.f32.mrb[0].mxu0
    %v1046 = vadd.f32 %v269, %v1045
    %v1047 = vpop.f32.mrb[0].mxu0
    %1048 = vmatprep.mubr.bf16.mxu0 0
    %1049 = vmatmul.mubr.bf16.gmra.mrb[0].mxu0 %v885
    %v1050 = vpop.f32.mrb[0].mxu0
    %v1051 = vadd.f32 %v274, %v1050
    %v1052 = vpop.f32.mrb[0].mxu0
    %v1053 = vpop.f32.mrb[0].mxu0
    %v1054 = vadd.f32 %v279, %v1053
    %v1055 = vpop.f32.mrb[0].mxu0
    %1056 = vmatprep.mubr.bf16.mxu0 0
    %1057 = vmatmul.mubr.bf16.gmra.mrb[0].mxu0 %v888
    %v1058 = vpop.f32.mrb[0].mxu0
    %v1059 = vadd.f32 %v284, %v1058
    %v1060 = vpop.f32.mrb[0].mxu0
    %v1061 = vpop.f32.mrb[0].mxu0
    %v1062 = vadd.f32 %v289, %v1061
    %v1063 = vpop.f32.mrb[0].mxu0
    %1064 = vmatprep.mubr.bf16.mxu0 0
    %1065 = vmatmul.mubr.bf16.gmra.mrb[0].mxu0 %v891
    %v1066 = vpop.f32.mrb[0].mxu0
    %v1067 = vadd.f32 %v294, %v1066
    %v1068 = vpop.f32.mrb[0].mxu0
    %v1069 = vpop.f32.mrb[0].mxu0
    %v1070 = vadd.f32 %v299, %v1069
    %v1071 = vpop.f32.mrb[0].mxu0
    %1072 = vmatprep.mubr.bf16.mxu0 0
    %1073 = vmatmul.mubr.bf16.gmra.mrb[0].mxu0 %v894
    %v1074 = vpop.f32.mrb[0].mxu0
    %v1075 = vadd.f32 %v304, %v1074
    %v1076 = vpop.f32.mrb[0].mxu0
    %v1077 = vpop.f32.mrb[0].mxu0
    %v1078 = vadd.f32 %v309, %v1077
    %v1079 = vpop.f32.mrb[0].mxu0
    %1080 = vdwg.mxu0
    %v1081 = vmax.f32 %v955, 0.0
    %v1082 = vmax.f32 %v958, 0.0
    %v1083 = vmax.f32 %v963, 0.0
    %v1084 = vmax.f32 %v966, 0.0
    %v1085 = vmax.f32 %v971, 0.0
    %v1086 = vmax.f32 %v974, 0.0
    %v1087 = vmax.f32 %v979, 0.0
    %v1088 = vmax.f32 %v982, 0.0
    %v1089 = vmax.f32 %v987, 0.0
    %v1090 = vmax.f32 %v990, 0.0
    %v1091 = vmax.f32 %v995, 0.0
    %v1092 = vmax.f32 %v998, 0.0
    %v1093 = vmax.f32 %v1003, 0.0
    %v1094 = vmax.f32 %v1006, 0.0
    %v1095 = vmax.f32 %v1011, 0.0
    %v1096 = vmax.f32 %v1014, 0.0
    %v1097 = vmax.f32 %v1019, 0.0
    %v1098 = vmax.f32 %v1022, 0.0
    %v1099 = vmax.f32 %v1027, 0.0
    %v1100 = vmax.f32 %v1030, 0.0
    %v1101 = vmax.f32 %v1035, 0.0
    %v1102 = vmax.f32 %v1038, 0.0
    %v1103 = vmax.f32 %v1043, 0.0
    %v1104 = vmax.f32 %v1046, 0.0
    %v1105 = vmax.f32 %v1051, 0.0
    %v1106 = vmax.f32 %v1054, 0.0
    %v1107 = vmax.f32 %v1059, 0.0
    %v1108 = vmax.f32 %v1062, 0.0
    %v1109 = vmax.f32 %v1067, 0.0
    %v1110 = vmax.f32 %v1070, 0.0
    %v1111 = vmax.f32 %v1075, 0.0
    %v1112 = vmax.f32 %v1078, 0.0
    %v1113 = vld [vmem:[%s3] sm:$0xff]
    %v1114 = vld [vmem:[%s3 + $0x8] sm:$0xff]
    %v1115 = vld [vmem:[%s3 + $0x10] sm:$0xff]
    %v1116 = vld [vmem:[%s3 + $0x18] sm:$0xff]
    %v1117 = vld [vmem:[%s3 + $0x20] sm:$0xff]
    %v1118 = vld [vmem:[%s3 + $0x28] sm:$0xff]
    %v1119 = vld [vmem:[%s3 + $0x30] sm:$0xff]
    %v1120 = vld [vmem:[%s3 + $0x38] sm:$0xff]
    %v1121 = vld [vmem:[%s3 + $0x40] sm:$0xff]
    %v1122 = vld [vmem:[%s3 + $0x48] sm:$0xff]
    %v1123 = vld [vmem:[%s3 + $0x50] sm:$0xff]
    %v1124 = vld [vmem:[%s3 + $0x58] sm:$0xff]
    %v1125 = vld [vmem:[%s3 + $0x60] sm:$0xff]
    %v1126 = vld [vmem:[%s3 + $0x68] sm:$0xff]
    %v1127 = vld [vmem:[%s3 + $0x70] sm:$0xff]
    %v1128 = vld [vmem:[%s3 + $0x78] sm:$0xff]
    %v1129 = vld [vmem:[%s3 + $0x80] sm:$0xff]
    %v1130 = vld [vmem:[%s3 + $0x88] sm:$0xff]
    %v1131 = vld [vmem:[%s3 + $0x90] sm:$0xff]
    %v1132 = vld [vmem:[%s3 + $0x98] sm:$0xff]
    %v1133 = vld [vmem:[%s3 + $0xa0] sm:$0xff]
    %v1134 = vld [vmem:[%s3 + $0xa8] sm:$0xff]
    %v1135 = vld [vmem:[%s3 + $0xb0] sm:$0xff]
    %v1136 = vld [vmem:[%s3 + $0xb8] sm:$0xff]
    %v1137 = vld [vmem:[%s3 + $0xc0] sm:$0xff]
    %v1138 = vld [vmem:[%s3 + $0xc8] sm:$0xff]
    %v1139 = vld [vmem:[%s3 + $0xd0] sm:$0xff]
    %v1140 = vld [vmem:[%s3 + $0xd8] sm:$0xff]
    %v1141 = vld [vmem:[%s3 + $0xe0] sm:$0xff]
    %v1142 = vld [vmem:[%s3 + $0xe8] sm:$0xff]
    %v1143 = vld [vmem:[%s3 + $0xf0] sm:$0xff]
    %v1144 = vld [vmem:[%s3 + $0xf8] sm:$0xff]
    %1146 = vset.pattern.permute.xlu0 0
    %1147 = vperm.xlu0 %1146, %v1113
    %v1148 = vpop.permute.xlu0 %1147
    %1151 = vset.pattern.permute.xlu0 0
    %1152 = vperm.xlu0 %1151, %v1114
    %v1153 = vpop.permute.xlu0 %1152
    %1156 = vset.pattern.permute.xlu0 0
    %1157 = vperm.xlu0 %1156, %v1115
    %v1158 = vpop.permute.xlu0 %1157
    %1161 = vset.pattern.permute.xlu0 0
    %1162 = vperm.xlu0 %1161, %v1116
    %v1163 = vpop.permute.xlu0 %1162
    %1166 = vset.pattern.permute.xlu0 0
    %1167 = vperm.xlu0 %1166, %v1117
    %v1168 = vpop.permute.xlu0 %1167
    %1171 = vset.pattern.permute.xlu0 0
    %1172 = vperm.xlu0 %1171, %v1118
    %v1173 = vpop.permute.xlu0 %1172
    %1176 = vset.pattern.permute.xlu0 0
    %1177 = vperm.xlu0 %1176, %v1119
    %v1178 = vpop.permute.xlu0 %1177
    %1181 = vset.pattern.permute.xlu0 0
    %1182 = vperm.xlu0 %1181, %v1120
    %v1183 = vpop.permute.xlu0 %1182
    %1186 = vset.pattern.permute.xlu0 0
    %1187 = vperm.xlu0 %1186, %v1121
    %v1188 = vpop.permute.xlu0 %1187
    %1191 = vset.pattern.permute.xlu0 0
    %1192 = vperm.xlu0 %1191, %v1122
    %v1193 = vpop.permute.xlu0 %1192
    %1196 = vset.pattern.permute.xlu0 0
    %1197 = vperm.xlu0 %1196, %v1123
    %v1198 = vpop.permute.xlu0 %1197
    %1201 = vset.pattern.permute.xlu0 0
    %1202 = vperm.xlu0 %1201, %v1124
    %v1203 = vpop.permute.xlu0 %1202
    %1206 = vset.pattern.permute.xlu0 0
    %1207 = vperm.xlu0 %1206, %v1125
    %v1208 = vpop.permute.xlu0 %1207
    %1211 = vset.pattern.permute.xlu0 0
    %1212 = vperm.xlu0 %1211, %v1126
    %v1213 = vpop.permute.xlu0 %1212
    %1216 = vset.pattern.permute.xlu0 0
    %1217 = vperm.xlu0 %1216, %v1127
    %v1218 = vpop.permute.xlu0 %1217
    %1221 = vset.pattern.permute.xlu0 0
    %1222 = vperm.xlu0 %1221, %v1128
    %v1223 = vpop.permute.xlu0 %1222
    %1226 = vset.pattern.permute.xlu0 0
    %1227 = vperm.xlu0 %1226, %v1129
    %v1228 = vpop.permute.xlu0 %1227
    %1231 = vset.pattern.permute.xlu0 0
    %1232 = vperm.xlu0 %1231, %v1130
    %v1233 = vpop.permute.xlu0 %1232
    %1236 = vset.pattern.permute.xlu0 0
    %1237 = vperm.xlu0 %1236, %v1131
    %v1238 = vpop.permute.xlu0 %1237
    %1241 = vset.pattern.permute.xlu0 0
    %1242 = vperm.xlu0 %1241, %v1132
    %v1243 = vpop.permute.xlu0 %1242
    %1246 = vset.pattern.permute.xlu0 0
    %1247 = vperm.xlu0 %1246, %v1133
    %v1248 = vpop.permute.xlu0 %1247
    %1251 = vset.pattern.permute.xlu0 0
    %1252 = vperm.xlu0 %1251, %v1134
    %v1253 = vpop.permute.xlu0 %1252
    %1256 = vset.pattern.permute.xlu0 0
    %1257 = vperm.xlu0 %1256, %v1135
    %v1258 = vpop.permute.xlu0 %1257
    %1261 = vset.pattern.permute.xlu0 0
    %1262 = vperm.xlu0 %1261, %v1136
    %v1263 = vpop.permute.xlu0 %1262
    %1266 = vset.pattern.permute.xlu0 0
    %1267 = vperm.xlu0 %1266, %v1137
    %v1268 = vpop.permute.xlu0 %1267
    %1271 = vset.pattern.permute.xlu0 0
    %1272 = vperm.xlu0 %1271, %v1138
    %v1273 = vpop.permute.xlu0 %1272
    %1276 = vset.pattern.permute.xlu0 0
    %1277 = vperm.xlu0 %1276, %v1139
    %v1278 = vpop.permute.xlu0 %1277
    %1281 = vset.pattern.permute.xlu0 0
    %1282 = vperm.xlu0 %1281, %v1140
    %v1283 = vpop.permute.xlu0 %1282
    %1286 = vset.pattern.permute.xlu0 0
    %1287 = vperm.xlu0 %1286, %v1141
    %v1288 = vpop.permute.xlu0 %1287
    %1291 = vset.pattern.permute.xlu0 0
    %1292 = vperm.xlu0 %1291, %v1142
    %v1293 = vpop.permute.xlu0 %1292
    %1296 = vset.pattern.permute.xlu0 0
    %1297 = vperm.xlu0 %1296, %v1143
    %v1298 = vpop.permute.xlu0 %1297
    %1301 = vset.pattern.permute.xlu0 0
    %1302 = vperm.xlu0 %1301, %v1144
    %v1303 = vpop.permute.xlu0 %1302
    %v1305 = vmul.f32 %v1081, %v1148
    %v1306 = vmul.f32 %v1082, %v1153
    %v1307 = vmul.f32 %v1083, %v1158
    %v1308 = vmul.f32 %v1084, %v1163
    %v1309 = vmul.f32 %v1085, %v1168
    %v1310 = vmul.f32 %v1086, %v1173
    %v1311 = vmul.f32 %v1087, %v1178
    %v1312 = vmul.f32 %v1088, %v1183
    %v1313 = vmul.f32 %v1089, %v1188
    %v1314 = vmul.f32 %v1090, %v1193
    %v1315 = vmul.f32 %v1091, %v1198
    %v1316 = vmul.f32 %v1092, %v1203
    %v1317 = vmul.f32 %v1093, %v1208
    %v1318 = vmul.f32 %v1094, %v1213
    %v1319 = vmul.f32 %v1095, %v1218
    %v1320 = vmul.f32 %v1096, %v1223
    %v1321 = vmul.f32 %v1097, %v1228
    %v1322 = vmul.f32 %v1098, %v1233
    %v1323 = vmul.f32 %v1099, %v1238
    %v1324 = vmul.f32 %v1100, %v1243
    %v1325 = vmul.f32 %v1101, %v1248
    %v1326 = vmul.f32 %v1102, %v1253
    %v1327 = vmul.f32 %v1103, %v1258
    %v1328 = vmul.f32 %v1104, %v1263
    %v1329 = vmul.f32 %v1105, %v1268
    %v1330 = vmul.f32 %v1106, %v1273
    %v1331 = vmul.f32 %v1107, %v1278
    %v1332 = vmul.f32 %v1108, %v1283
    %v1333 = vmul.f32 %v1109, %v1288
    %v1334 = vmul.f32 %v1110, %v1293
    %v1335 = vmul.f32 %v1111, %v1298
    %v1336 = vmul.f32 %v1112, %v1303
    %v1337 = vadd.f32 %v1305, %v1306
    %v1338 = vadd.f32 %v1337, %v1307
    %v1339 = vadd.f32 %v1338, %v1308
    %v1340 = vadd.f32 %v1339, %v1309
    %v1341 = vadd.f32 %v1340, %v1310
    %v1342 = vadd.f32 %v1341, %v1311
    %v1343 = vadd.f32 %v1342, %v1312
    %v1344 = vadd.f32 %v1343, %v1313
    %v1345 = vadd.f32 %v1344, %v1314
    %v1346 = vadd.f32 %v1345, %v1315
    %v1347 = vadd.f32 %v1346, %v1316
    %v1348 = vadd.f32 %v1347, %v1317
    %v1349 = vadd.f32 %v1348, %v1318
    %v1350 = vadd.f32 %v1349, %v1319
    %v1351 = vadd.f32 %v1350, %v1320
    %v1352 = vadd.f32 %v1351, %v1321
    %v1353 = vadd.f32 %v1352, %v1322
    %v1354 = vadd.f32 %v1353, %v1323
    %v1355 = vadd.f32 %v1354, %v1324
    %v1356 = vadd.f32 %v1355, %v1325
    %v1357 = vadd.f32 %v1356, %v1326
    %v1358 = vadd.f32 %v1357, %v1327
    %v1359 = vadd.f32 %v1358, %v1328
    %v1360 = vadd.f32 %v1359, %v1329
    %v1361 = vadd.f32 %v1360, %v1330
    %v1362 = vadd.f32 %v1361, %v1331
    %v1363 = vadd.f32 %v1362, %v1332
    %v1364 = vadd.f32 %v1363, %v1333
    %v1365 = vadd.f32 %v1364, %v1334
    %v1366 = vadd.f32 %v1365, %v1335
    %v1367 = vadd.f32 %v1366, %v1336
    %v1368 = vrot.slane %v1367, 4
    %v1369 = vadd.f32 %v1367, %v1368
    %v1370 = vrot.slane %v1369, 2
    %v1371 = vadd.f32 %v1369, %v1370
    %v1372 = vrot.slane %v1371, 1
    %v1373 = vadd.f32 %v1371, %v1372
    %s1374 = sld [smem:[#allocation2]]
    %v1375 = vstv %s1374
    %v1376 = vadd.f32 %v1373, %v1375
    %1377 = vst [vmem:[#allocation3] sm:$0x1] %v1376
    // Predicated region
    $region22: #{critic_forward.1} parent=1 // pred_check
      _
    $region23: #{critic_forward.1} parent=1 // pred_check_branch
      %1379 = sbr.rel (0) target = $region25
    $region24: #{critic_forward.1} parent=1 // pred_region
      %s1381 = ssub.s32 16, 16
      %1382 = vsyncadd [#allocation4], %s1381
      %s1384 = sshll.u32 [#allocation3], 4
      %s1385 = int_to_ptr.vmem [resolvable:$true] %s1384
      %1387 = dma.vmem_to_hbm [thread:$0]  %s1385, 16, %s5, [#allocation4]
    $region25: #{critic_forward.1} parent=1 // pred_fallthru
      _
    // Predicated region
    $region26: #{critic_forward.1} parent=1 // pred_check
      _
    $region27: #{critic_forward.1} parent=1 // pred_check_branch
      %1389 = sbr.rel (0) target = $region29
    $region28: #{critic_forward.1} parent=1 // pred_region
      %1390 = dma.done [#allocation4], 16
    $region29: #{critic_forward.1} parent=1 // pred_fallthru
      _
    %1391 = vsyncpa [#allocation4], 1

</llo_original>
